<compile_context>
chip_gen: v5e
topology: v5e:2x2
jax: 0.10.0
libtpu: 0.0.40
codegen_flags: <defaults>
</compile_context>

<pallas_src>
import jax
import jax.numpy as jnp
from jax.experimental import pallas as pl
from jax.experimental.pallas import tpu as pltpu

EPS = 1e-5
K = 3  # kernel size (3x3, stride 1, padding 1)


# ----------------------------------------------------------------------------- kernels
def conv_stats_kernel(xrow_ref, wt_ref, out_ref, sum_ref, sq_ref):
    """Per-image conv (K row-GEMMs against a dx-Toeplitz weight) + BN-stat partials.

    xrow_ref: (1, H+2, (W+2)*Cin)     padded input rows, channel-flattened
    wt_ref  : (K, (W+2)*Cin, W*Cout)  block-Toeplitz weights (dx taps folded in)
    out_ref : (1, H, W*Cout)          lane-dense conv activations for this image
    sum_ref : (1, 1, W*Cout)          per-image per-column sum        (BN mean)
    sq_ref  : (1, 1, W*Cout)          per-image per-column sum of sq  (BN var)
    """
    H = out_ref.shape[1]
    acc = jnp.zeros(out_ref.shape[1:], jnp.float32)        # (H, W*Cout): a few vregs
    for dy in range(K):  # dx taps already folded into wt -> only K matmuls total
        acc = acc + jnp.dot(xrow_ref[0, dy:dy + H, :], wt_ref[dy],
                            preferred_element_type=jnp.float32)
    out_ref[0] = acc
    # single pass over the activations for the BN statistics (sum / sum of squares)
    sum_ref[0] = jnp.sum(acc, axis=0, keepdims=True)
    sq_ref[0] = jnp.sum(acc * acc, axis=0, keepdims=True)


def bn_relu_kernel(y_ref, scale_ref, shift_ref, out_ref):
    """Fused BN affine + ReLU: one FMA + max pass over lane-dense row tiles."""
    out_ref[...] = jnp.maximum(y_ref[...] * scale_ref[...] + shift_ref[...], 0.0)


# ----------------------------------------------------------------------------- wrapper
def _row_tile(nh):
    """Largest power-of-two row tile (multiple of 8) that divides nh, capped at 512."""
    for t in (512, 256, 128, 64, 32, 16, 8):
        if nh % t == 0:
            return t
    return nh  # fallback: single whole-array block (always a legal block shape)


def conv2d_normed_relu_block(x_nchw, weight_oihw, bias, gamma, beta,
                             kernel_size=3, stride=1, padding=1):
    """PyTorch-equivalent forward. x_nchw: (N, Cin, H, W) float32 -> (N, Cout, H, W)."""
    assert kernel_size == K and stride == 1 and padding == 1
    del bias  # conv bias cancels exactly under training-mode BN (mean subtraction)

    N, Cin, H, W = x_nchw.shape
    Cout = weight_oihw.shape[0]
    Hp, Wp = H + 2 * padding, W + 2 * padding
    WC = W * Cout  # lane dim of the working layout (=128 for W=16, Cout=8)

    # ---- glue: NCHW -> padded NHWC -> row-flattened (N, Hp, Wp*Cin), f32
    x = jnp.transpose(x_nchw, (0, 2, 3, 1)).astype(jnp.float32)
    xrow = jnp.pad(
        x, ((0, 0), (padding, padding), (padding, padding), (0, 0))
    ).reshape(N, Hp, Wp * Cin)

    # ---- glue: fold the dx taps into a block-Toeplitz weight (built once, tiny)
    # wt[dy, p*Cin + c, x*Cout + o] = weight[o, c, dy, p - x]   for 0 <= p-x < K, else 0
    onehot = (jnp.arange(Wp)[None, None, :] ==
              (jnp.arange(W)[None, :, None] + jnp.arange(K)[:, None, None])
              ).astype(jnp.float32)                                    # (Kdx, W, Wp)
    w_t = jnp.transpose(weight_oihw, (2, 3, 1, 0)).astype(jnp.float32)  # (Kdy,Kdx,Cin,Cout)
    wt = jnp.einsum('dxp,ydco->ypcxo', onehot, w_t).reshape(K, Wp * Cin, WC)

    # ---- kernel 1: conv + per-image stat partials (grid over images, parallel)
    conv3, csum, csq = pl.pallas_call(
        conv_stats_kernel,
        out_shape=(jax.ShapeDtypeStruct((N, H, WC), jnp.float32),
                   jax.ShapeDtypeStruct((N, 1, WC), jnp.float32),
                   jax.ShapeDtypeStruct((N, 1, WC), jnp.float32)),
        grid=(N,),
        in_specs=[pl.BlockSpec((1, Hp, Wp * Cin), lambda n: (n, 0, 0)),
                  pl.BlockSpec((K, Wp * Cin, WC), lambda n: (0, 0, 0))],
        out_specs=(pl.BlockSpec((1, H, WC), lambda n: (n, 0, 0)),
                   pl.BlockSpec((1, 1, WC), lambda n: (n, 0, 0)),
                   pl.BlockSpec((1, 1, WC), lambda n: (n, 0, 0))),
        compiler_params=pltpu.CompilerParams(dimension_semantics=("parallel",)),
        cost_estimate=pl.CostEstimate(
            flops=2 * N * H * W * K * K * Cin * Cout, transcendentals=0,
            bytes_accessed=4 * (xrow.size + wt.size + N * H * WC + 2 * N * WC)),
    )(xrow, wt)

    # ---- glue: combine tiny per-image partials into fused BN scale/shift (Cout values)
    cnt = N * H * W
    sums = jnp.sum(csum, axis=(0, 1)).reshape(W, Cout).sum(axis=0)   # (Cout,)
    sqs = jnp.sum(csq, axis=(0, 1)).reshape(W, Cout).sum(axis=0)     # (Cout,)
    mean = sums / cnt
    var = sqs / cnt - mean * mean                 # biased (training-mode) variance
    scale = gamma.astype(jnp.float32) * jax.lax.rsqrt(var + EPS)
    shift = beta.astype(jnp.float32) - mean * scale
    scale_row = jnp.tile(scale, W).reshape(1, WC)  # per-lane broadcast rows
    shift_row = jnp.tile(shift, W).reshape(1, WC)

    # ---- kernel 2: fused normalize + ReLU over lane-dense row tiles (parallel)
    NH = N * H
    TR = _row_tile(NH)
    out2d = pl.pallas_call(
        bn_relu_kernel,
        out_shape=jax.ShapeDtypeStruct((NH, WC), jnp.float32),
        grid=(NH // TR,),
        in_specs=[pl.BlockSpec((TR, WC), lambda i: (i, 0)),
                  pl.BlockSpec((1, WC), lambda i: (0, 0)),
                  pl.BlockSpec((1, WC), lambda i: (0, 0))],
        out_specs=pl.BlockSpec((TR, WC), lambda i: (i, 0)),
        compiler_params=pltpu.CompilerParams(dimension_semantics=("parallel",)),
        cost_estimate=pl.CostEstimate(
            flops=3 * NH * WC, transcendentals=0,
            bytes_accessed=4 * (2 * NH * WC + 2 * WC)),
    )(conv3.reshape(NH, WC), scale_row, shift_row)

    # ---- glue: (N*H, W*Cout) -> NHWC -> NCHW
    return jnp.transpose(out2d.reshape(N, H, W, Cout), (0, 3, 1, 2))


# ----------------------------------------------------------------------------- reference
def _reference(x_nchw, weight_oihw, bias, gamma, beta):
    """Pure-JAX reference (conv + training-mode BN + ReLU)."""
    y = jax.lax.conv_general_dilated(
        x_nchw, weight_oihw, window_strides=(1, 1), padding=((1, 1), (1, 1)),
        dimension_numbers=("NCHW", "OIHW", "NCHW"),
    ) + bias[None, :, None, None]
    mean = jnp.mean(y, axis=(0, 2, 3), keepdims=True)
    var = jnp.mean((y - mean) ** 2, axis=(0, 2, 3), keepdims=True)
    y = (y - mean) * jax.lax.rsqrt(var + EPS) * gamma[None, :, None, None] \
        + beta[None, :, None, None]
    return jnp.maximum(y, 0.0)


if __name__ == "__main__":
    # Module config: in_channels=4, out_channels=8, kernel_size=3, stride=1, padding=1
    N, Cin, Cout, H, W = 2, 4, 8, 16, 16

    key = jax.random.PRNGKey(0)
    kx, kw, kb, kg, kbt = jax.random.split(key, 5)

    x = jax.random.normal(kx, (N, Cin, H, W), dtype=jnp.float32)
    fan_in = Cin * K * K
    weight = jax.random.normal(kw, (Cout, Cin, K, K), dtype=jnp.float32) / jnp.sqrt(fan_in)
    bias = jax.random.normal(kb, (Cout,), dtype=jnp.float32) * 0.1
    gamma = 1.0 + 0.1 * jax.random.normal(kg, (Cout,), dtype=jnp.float32)
    beta = 0.1 * jax.random.normal(kbt, (Cout,), dtype=jnp.float32)

    out = conv2d_normed_relu_block(x, weight, bias, gamma, beta)
    out = jax.block_until_ready(out)

    ref = jax.block_until_ready(_reference(x, weight, bias, gamma, beta))
    assert out.shape == (N, Cout, H, W)
    assert jnp.max(jnp.abs(out - ref)) < 2e-3, "mismatch vs reference"

    # TODO(synk): BatchNorm2d running_mean/running_var buffer updates (training side
    # effect) are not modeled; they do not affect this forward output.
    print("KERNEL_OK")
</pallas_src>

<mosaic_0001>
module attributes {stable_mosaic.version = 11 : i64} {
  func.func @conv_stats_kernel(%arg0: i32, %arg1: memref<1x18x72xf32, #tpu.memory_space<vmem>>, %arg2: memref<3x72x128xf32, #tpu.memory_space<vmem>>, %arg3: memref<1x16x128xf32, #tpu.memory_space<vmem>>, %arg4: memref<1x1x128xf32, #tpu.memory_space<vmem>>, %arg5: memref<1x1x128xf32, #tpu.memory_space<vmem>>) attributes {dimension_semantics = [#tpu.dimension_semantics<parallel>], iteration_bounds = array<i64: 2>, scalar_prefetch = 0 : i64, scratch_operands = 0 : i64, tpu.core_type = #tpu.core_type<tc>, window_params = [{transform_indices = @transform_0, window_bounds = array<i64: 1, 18, 72>}, {pipeline_mode = #tpu.pipeline_mode<synchronous>, transform_indices = @transform_1, window_bounds = array<i64: 3, 72, 128>}, {transform_indices = @transform_2, window_bounds = array<i64: 1, 16, 128>}, {transform_indices = @transform_3, window_bounds = array<i64: 1, 1, 128>}, {transform_indices = @transform_4, window_bounds = array<i64: 1, 1, 128>}]} {
    %cst = arith.constant 0.000000e+00 : f32
    %0 = vector.broadcast %cst : f32 to vector<16x128xf32>
    %c0 = arith.constant 0 : index
    %c0_0 = arith.constant 0 : index
    %c0_1 = arith.constant 0 : index
    %1 = vector.load %arg1[%c0, %c0_0, %c0_1] : memref<1x18x72xf32, #tpu.memory_space<vmem>>, vector<1x16x72xf32>
    %2 = vector.shape_cast %1 : vector<1x16x72xf32> to vector<16x72xf32>
    %c0_2 = arith.constant 0 : index
    %c0_3 = arith.constant 0 : index
    %c0_4 = arith.constant 0 : index
    %3 = vector.load %arg2[%c0_2, %c0_3, %c0_4] : memref<3x72x128xf32, #tpu.memory_space<vmem>>, vector<1x72x128xf32>
    %4 = vector.shape_cast %3 : vector<1x72x128xf32> to vector<72x128xf32>
    %cst_5 = arith.constant dense<0.000000e+00> : vector<16x128xf32>
    %5 = tpu.matmul %2, %4, %cst_5 {dimension_numbers = #tpu.dot_dimension_numbers<[1], [0], [0], [1], [0, 0, 1, 1], [], []>} : vector<16x72xf32>, vector<72x128xf32>, vector<16x128xf32> -> vector<16x128xf32>
    %6 = arith.addf %0, %5 : vector<16x128xf32>
    %c0_6 = arith.constant 0 : index
    %c1 = arith.constant 1 : index
    %c0_7 = arith.constant 0 : index
    %7 = vector.load %arg1[%c0_6, %c1, %c0_7] : memref<1x18x72xf32, #tpu.memory_space<vmem>>, vector<1x16x72xf32>
    %8 = vector.shape_cast %7 : vector<1x16x72xf32> to vector<16x72xf32>
    %c1_8 = arith.constant 1 : index
    %c0_9 = arith.constant 0 : index
    %c0_10 = arith.constant 0 : index
    %9 = vector.load %arg2[%c1_8, %c0_9, %c0_10] : memref<3x72x128xf32, #tpu.memory_space<vmem>>, vector<1x72x128xf32>
    %10 = vector.shape_cast %9 : vector<1x72x128xf32> to vector<72x128xf32>
    %cst_11 = arith.constant dense<0.000000e+00> : vector<16x128xf32>
    %11 = tpu.matmul %8, %10, %cst_11 {dimension_numbers = #tpu.dot_dimension_numbers<[1], [0], [0], [1], [0, 0, 1, 1], [], []>} : vector<16x72xf32>, vector<72x128xf32>, vector<16x128xf32> -> vector<16x128xf32>
    %12 = arith.addf %6, %11 : vector<16x128xf32>
    %c0_12 = arith.constant 0 : index
    %c2 = arith.constant 2 : index
    %c0_13 = arith.constant 0 : index
    %13 = vector.load %arg1[%c0_12, %c2, %c0_13] : memref<1x18x72xf32, #tpu.memory_space<vmem>>, vector<1x16x72xf32>
    %14 = vector.shape_cast %13 : vector<1x16x72xf32> to vector<16x72xf32>
    %c2_14 = arith.constant 2 : index
    %c0_15 = arith.constant 0 : index
    %c0_16 = arith.constant 0 : index
    %15 = vector.load %arg2[%c2_14, %c0_15, %c0_16] : memref<3x72x128xf32, #tpu.memory_space<vmem>>, vector<1x72x128xf32>
    %16 = vector.shape_cast %15 : vector<1x72x128xf32> to vector<72x128xf32>
    %cst_17 = arith.constant dense<0.000000e+00> : vector<16x128xf32>
    %17 = tpu.matmul %14, %16, %cst_17 {dimension_numbers = #tpu.dot_dimension_numbers<[1], [0], [0], [1], [0, 0, 1, 1], [], []>} : vector<16x72xf32>, vector<72x128xf32>, vector<16x128xf32> -> vector<16x128xf32>
    %18 = arith.addf %12, %17 : vector<16x128xf32>
    %c0_18 = arith.constant 0 : index
    %c0_19 = arith.constant 0 : index
    %c0_20 = arith.constant 0 : index
    %19 = vector.load %arg3[%c0_18, %c0_19, %c0_20] : memref<1x16x128xf32, #tpu.memory_space<vmem>>, vector<1x16x128xf32>
    %20 = vector.shape_cast %19 : vector<1x16x128xf32> to vector<16x128xf32>
    %21 = vector.shape_cast %18 : vector<16x128xf32> to vector<1x16x128xf32>
    tpu.vector_store %arg3[%c0_18, %c0_19, %c0_20], %21 {strides = array<i32>} : memref<1x16x128xf32, #tpu.memory_space<vmem>>, vector<1x16x128xf32>,
    %cst_21 = arith.constant dense<0.000000e+00> : vector<128xf32>
    %22 = vector.multi_reduction <add>, %18, %cst_21 [0] : vector<16x128xf32> to vector<128xf32>
    %23 = vector.shape_cast %22 : vector<128xf32> to vector<1x128xf32>
    %c0_22 = arith.constant 0 : index
    %c0_23 = arith.constant 0 : index
    %c0_24 = arith.constant 0 : index
    %24 = vector.load %arg4[%c0_22, %c0_23, %c0_24] : memref<1x1x128xf32, #tpu.memory_space<vmem>>, vector<1x1x128xf32>
    %25 = vector.shape_cast %24 : vector<1x1x128xf32> to vector<1x128xf32>
    %26 = vector.shape_cast %23 : vector<1x128xf32> to vector<1x1x128xf32>
    tpu.vector_store %arg4[%c0_22, %c0_23, %c0_24], %26 {strides = array<i32>} : memref<1x1x128xf32, #tpu.memory_space<vmem>>, vector<1x1x128xf32>,
    %27 = arith.mulf %18, %18 : vector<16x128xf32>
    %cst_25 = arith.constant dense<0.000000e+00> : vector<128xf32>
    %28 = vector.multi_reduction <add>, %27, %cst_25 [0] : vector<16x128xf32> to vector<128xf32>
    %29 = vector.shape_cast %28 : vector<128xf32> to vector<1x128xf32>
    %c0_26 = arith.constant 0 : index
    %c0_27 = arith.constant 0 : index
    %c0_28 = arith.constant 0 : index
    %30 = vector.load %arg5[%c0_26, %c0_27, %c0_28] : memref<1x1x128xf32, #tpu.memory_space<vmem>>, vector<1x1x128xf32>
    %31 = vector.shape_cast %30 : vector<1x1x128xf32> to vector<1x128xf32>
    %32 = vector.shape_cast %29 : vector<1x128xf32> to vector<1x1x128xf32>
    tpu.vector_store %arg5[%c0_26, %c0_27, %c0_28], %32 {strides = array<i32>} : memref<1x1x128xf32, #tpu.memory_space<vmem>>, vector<1x1x128xf32>,
    return
  }
  func.func @transform_0(%arg0: i32) -> (i32, i32, i32) {
    %c0_i32 = arith.constant 0 : i32
    %c0_i32_0 = arith.constant 0 : i32
    %c0_i32_1 = arith.constant 0 : i32
    return %arg0, %c0_i32, %c0_i32_0 : i32, i32, i32
  }
  func.func @transform_1(%arg0: i32) -> (i32, i32, i32) {
    %c0_i32 = arith.constant 0 : i32
    %c0_i32_0 = arith.constant 0 : i32
    %c0_i32_1 = arith.constant 0 : i32
    %c0_i32_2 = arith.constant 0 : i32
    return %c0_i32, %c0_i32_0, %c0_i32_1 : i32, i32, i32
  }
  func.func @transform_2(%arg0: i32) -> (i32, i32, i32) {
    %c0_i32 = arith.constant 0 : i32
    %c0_i32_0 = arith.constant 0 : i32
    %c0_i32_1 = arith.constant 0 : i32
    return %arg0, %c0_i32, %c0_i32_0 : i32, i32, i32
  }
  func.func @transform_3(%arg0: i32) -> (i32, i32, i32) {
    %c0_i32 = arith.constant 0 : i32
    %c0_i32_0 = arith.constant 0 : i32
    %c0_i32_1 = arith.constant 0 : i32
    return %arg0, %c0_i32, %c0_i32_0 : i32, i32, i32
  }
  func.func @transform_4(%arg0: i32) -> (i32, i32, i32) {
    %c0_i32 = arith.constant 0 : i32
    %c0_i32_0 = arith.constant 0 : i32
    %c0_i32_1 = arith.constant 0 : i32
    return %arg0, %c0_i32, %c0_i32_0 : i32, i32, i32
  }
}

</mosaic_0001>

<llo_original>
// kernel: tpu_custom_call.1
$region0: #{tpu_custom_call.1}
  #allocation0 [shape = 'u32[]', space=smem, size = 0x4, offset = 0x4, fixed_abs, tag = 'smem constant byte address 0x4 - core index']
  #allocation1 [shape = 'u32[72,128]{1,0:T(1,128)}', space=vmem, size = 0x9000, scoped, tag = 'internal scratch']
  %s0 = inlined_call_operand.vmem [shape: f32[2,18,72], index: 0, kind: input, shape index: {}]
  %s1 = inlined_call_operand.hbm [shape: f32[3,72,128], index: 1, kind: input, shape index: {}]
  %s2 = inlined_call_operand.hbm [shape: f32[2,16,128], index: 2, kind: output, shape index: {0}]
  %s3 = inlined_call_operand.hbm [shape: f32[2,1,128], index: 3, kind: output, shape index: {1}]
  %s4 = inlined_call_operand.hbm [shape: f32[2,1,128], index: 4, kind: output, shape index: {2}]
  %5 = xla_tuple %s2, %s3, %s4
  %s6 = sld [smem:[#allocation0]]
  $region61: #{tpu_custom_call.1} parent=0
    _
  %s8 = ssub.s32 1, %s6
  %s9 = scalar_select 0, %s8, %s6
  $region1: #{tpu_custom_call.1} parent=0
    #allocation2 [shape = 'u8[110592]{0}', space=vmem, size = 0x1b000, scoped, tag = 'input window, operand 1, single buffered']
    #allocation3 [shape = 's32[2]{0}', space=sflag, size = 0x8, scoped, tag = 'scoped memory for tpu_custom_call.1']
    #allocation4 [shape = 's32[2]{0}', space=sflag, size = 0x8, scoped, tag = 'scoped memory for tpu_custom_call.1']
    #allocation5 [shape = 'u8[16384]{0}', space=vmem, size = 0x4000, scoped, tag = 'output window, operand 0']
    #allocation6 [shape = 'u8[1024]{0}', space=vmem, size = 0x400, scoped, tag = 'output window, operand 1']
    #allocation7 [shape = 's32[2]{0}', space=sflag, size = 0x8, scoped, tag = 'scoped memory for tpu_custom_call.1']
    #allocation8 [shape = 'u8[1024]{0}', space=vmem, size = 0x400, scoped, tag = 'output window, operand 2']
    %10 = vsyncpa [#allocation3], 0
    %11 = vsyncpa [#allocation4], 0
    %s12 = scalar_lea.sflag [#allocation4], 1
    %13 = vsyncpa %s12, 0
    %14 = vsyncpa [#allocation7], 0
    %s15 = scalar_lea.sflag [#allocation7], 1
    %16 = vsyncpa %s15, 0
    loop: start=0, step=1, limit=4
    $region2: #{tpu_custom_call.1} parent=1 // loop_pre_header
      _
    $region3: #{tpu_custom_call.1} parent=1 // loop_header
      %s18 = sphi 0, %s22
      %p19 = scmp.ge.s32.totalorder %s18, 4
      %s28 = sphi 0, %s30
      %s31 = sphi 0, %s28
      %s32 = sphi 0, %s31
      %s48 = sphi 0, %s32
      %s52 = sphi 0, %s52
      %s54 = sphi 0, %s52
      %s55 = sphi 0, %s54
      %s69 = sphi 0, %s55
      %s75 = sphi 0, %s77
      %s78 = sphi 0, %s75
      %s79 = sphi 0, %s78
      %s95 = sphi 0, %s79
      %s101 = sphi 0, %s103
      %s104 = sphi 0, %s101
      %s105 = sphi 0, %s104
      %s121 = sphi 0, %s105
      %s127 = sphi 0, %s129
      %s130 = sphi 0, %s127
      %s131 = sphi 0, %s130
      %s147 = sphi 0, %s131
    $region4: #{tpu_custom_call.1} parent=1 // loop_header_branch
      %21 = sbr.rel (%p19) target = $region8
    $region5: #{tpu_custom_call.1} parent=1 // loop_body
      %s23 = ssub.s32 %s18, 1
      %s24 = ssub.s32 %s18, 2
      %s25 = sadd.s32 %s18, 1
      %s26 = ssub.s32 %s18, %s25
      %p27 = scmp.eq.s32.totalorder %s26, 0
      %s29 = sadd.s32 %s28, 1
      %s30 = scalar_select %p27, %s28, %s29
      %p33 = pneg %p27
      %p34 = scmp.eq.s32.totalorder %s18, 1
      %p35 = por %p33, %p34
      %p36 = scmp.ne.s32.totalorder %s28, %s31
      %p37 = scmp.eq.s32.totalorder %s18, 0
      %p38 = por %p36, %p37
      %p39 = scmp.ne.s32.totalorder %s28, %s31
      %p40 = scmp.eq.s32.totalorder %s23, 1
      %p41 = por %p39, %p40
      %p42 = scmp.ne.s32.totalorder %s31, %s32
      %p43 = scmp.eq.s32.totalorder %s23, 0
      %p44 = por %p42, %p43
      %p45 = scmp.ne.s32.totalorder %s31, %s32
      %p46 = scmp.eq.s32.totalorder %s24, 1
      %p47 = por %p45, %p46
      %p49 = scmp.ne.s32.totalorder %s32, %s48
      %p50 = scmp.eq.s32.totalorder %s24, 0
      %p51 = por %p49, %p50
      %s53 = sadd.s32 %s52, 1
      %p56 = scmp.eq.s32.totalorder %s18, 1
      %p57 = scmp.ne.s32.totalorder %s52, %s54
      %p58 = scmp.eq.s32.totalorder %s18, 0
      %p59 = por %p57, %p58
      %p60 = scmp.ne.s32.totalorder %s52, %s54
      %p61 = scmp.eq.s32.totalorder %s23, 1
      %p62 = por %p60, %p61
      %p63 = scmp.ne.s32.totalorder %s54, %s55
      %p64 = scmp.eq.s32.totalorder %s23, 0
      %p65 = por %p63, %p64
      %p66 = scmp.ne.s32.totalorder %s54, %s55
      %p67 = scmp.eq.s32.totalorder %s24, 1
      %p68 = por %p66, %p67
      %p70 = scmp.ne.s32.totalorder %s55, %s69
      %p71 = scmp.eq.s32.totalorder %s24, 0
      %p72 = por %p70, %p71
      %s73 = ssub.s32 %s18, %s25
      %p74 = scmp.eq.s32.totalorder %s73, 0
      %s76 = sadd.s32 %s75, 1
      %s77 = scalar_select %p74, %s75, %s76
      %p80 = pneg %p74
      %p81 = scmp.eq.s32.totalorder %s18, 1
      %p82 = por %p80, %p81
      %p83 = scmp.ne.s32.totalorder %s75, %s78
      %p84 = scmp.eq.s32.totalorder %s18, 0
      %p85 = por %p83, %p84
      %p86 = scmp.ne.s32.totalorder %s75, %s78
      %p87 = scmp.eq.s32.totalorder %s23, 1
      %p88 = por %p86, %p87
      %p89 = scmp.ne.s32.totalorder %s78, %s79
      %p90 = scmp.eq.s32.totalorder %s23, 0
      %p91 = por %p89, %p90
      %p92 = scmp.ne.s32.totalorder %s78, %s79
      %p93 = scmp.eq.s32.totalorder %s24, 1
      %p94 = por %p92, %p93
      %p96 = scmp.ne.s32.totalorder %s79, %s95
      %p97 = scmp.eq.s32.totalorder %s24, 0
      %p98 = por %p96, %p97
      %s99 = ssub.s32 %s18, %s25
      %p100 = scmp.eq.s32.totalorder %s99, 0
      %s102 = sadd.s32 %s101, 1
      %s103 = scalar_select %p100, %s101, %s102
      %p106 = pneg %p100
      %p107 = scmp.eq.s32.totalorder %s18, 1
      %p108 = por %p106, %p107
      %p109 = scmp.ne.s32.totalorder %s101, %s104
      %p110 = scmp.eq.s32.totalorder %s18, 0
      %p111 = por %p109, %p110
      %p112 = scmp.ne.s32.totalorder %s101, %s104
      %p113 = scmp.eq.s32.totalorder %s23, 1
      %p114 = por %p112, %p113
      %p115 = scmp.ne.s32.totalorder %s104, %s105
      %p116 = scmp.eq.s32.totalorder %s23, 0
      %p117 = por %p115, %p116
      %p118 = scmp.ne.s32.totalorder %s104, %s105
      %p119 = scmp.eq.s32.totalorder %s24, 1
      %p120 = por %p118, %p119
      %p122 = scmp.ne.s32.totalorder %s105, %s121
      %p123 = scmp.eq.s32.totalorder %s24, 0
      %p124 = por %p122, %p123
      %s125 = ssub.s32 %s18, %s25
      %p126 = scmp.eq.s32.totalorder %s125, 0
      %s128 = sadd.s32 %s127, 1
      %s129 = scalar_select %p126, %s127, %s128
      %p132 = pneg %p126
      %p133 = scmp.eq.s32.totalorder %s18, 1
      %p134 = por %p132, %p133
      %p135 = scmp.ne.s32.totalorder %s127, %s130
      %p136 = scmp.eq.s32.totalorder %s18, 0
      %p137 = por %p135, %p136
      %p138 = scmp.ne.s32.totalorder %s127, %s130
      %p139 = scmp.eq.s32.totalorder %s23, 1
      %p140 = por %p138, %p139
      %p141 = scmp.ne.s32.totalorder %s130, %s131
      %p142 = scmp.eq.s32.totalorder %s23, 0
      %p143 = por %p141, %p142
      %p144 = scmp.ne.s32.totalorder %s130, %s131
      %p145 = scmp.eq.s32.totalorder %s24, 1
      %p146 = por %p144, %p145
      %p148 = scmp.ne.s32.totalorder %s131, %s147
      %p149 = scmp.eq.s32.totalorder %s24, 0
      %p150 = por %p148, %p149
      %p151 = scmp.le.s32.totalorder 1, %s18
      %p152 = scmp.lt.s32.totalorder %s18, 3
      %p153 = pnand %p151, %p152
      %p154 = pneg %p153
      // Predicated region
      $region9: #{tpu_custom_call.1} parent=5 // pred_check
        _
      $region10: #{tpu_custom_call.1} parent=5 // pred_check_branch
        %156 = sbr.rel (%p153) target = $region12
      $region11: #{tpu_custom_call.1} parent=5 // pred_region
        %s157 = ssub.s32 %s18, 1
        // Predicated region
        $region13: #{tpu_custom_call.1} parent=11 // pred_check
          %p158 = pneg %p65
        $region14: #{tpu_custom_call.1} parent=11 // pred_check_branch
          %160 = sbr.rel (%p158) target = $region16
        $region15: #{tpu_custom_call.1} parent=11 // pred_region
          %162 = vsyncadd [#allocation3], 0
          %s163 = sshll.u32 %s1, 4
          %s164 = int_to_ptr.hbm [resolvable:$true] %s163
          %s165 = sshll.u32 [#allocation2], 4
          %s166 = int_to_ptr.vmem [resolvable:$true] %s165
          %171 = dma.hbm_to_vmem [thread:$0]  %s164, 3456, %s166, [#allocation3], 128, 128, 8
        $region16: #{tpu_custom_call.1} parent=11 // pred_fallthru
          _
      $region12: #{tpu_custom_call.1} parent=5 // pred_fallthru
        _
      %p172 = scmp.lt.s32.totalorder %s18, 2
      // Predicated region
      $region17: #{tpu_custom_call.1} parent=5 // pred_check
        %p173 = pneg %p172
      $region18: #{tpu_custom_call.1} parent=5 // pred_check_branch
        %175 = sbr.rel (%p173) target = $region20
      $region19: #{tpu_custom_call.1} parent=5 // pred_region
        // Predicated region
        $region21: #{tpu_custom_call.1} parent=19 // pred_check
          %p176 = pneg %p38
        $region22: #{tpu_custom_call.1} parent=19 // pred_check_branch
          %178 = sbr.rel (%p176) target = $region24
        $region23: #{tpu_custom_call.1} parent=19 // pred_region
          %p179 = scmp.lt.s32.totalorder %s18, 1
          %s180 = scalar_select %p179, %s18, 1
          %s181 = smul.addr %s180, 3
          %s182 = smul.addr %s181, 8
          %s183 = scalar_lea.vmem %s0, %s182
        $region24: #{tpu_custom_call.1} parent=19 // pred_fallthru
          _
      $region20: #{tpu_custom_call.1} parent=5 // pred_fallthru
        _
      %p184 = scmp.le.s32.totalorder 1, %s18
      %p185 = scmp.lt.s32.totalorder %s18, 3
      %p186 = pnand %p184, %p185
      %p187 = pneg %p186
      // Predicated region
      $region25: #{tpu_custom_call.1} parent=5 // pred_check
        _
      $region26: #{tpu_custom_call.1} parent=5 // pred_check_branch
        %189 = sbr.rel (%p186) target = $region28
      $region27: #{tpu_custom_call.1} parent=5 // pred_region
        %s190 = ssub.s32 %s18, 1
        // Predicated region
        $region29: #{tpu_custom_call.1} parent=27 // pred_check
          %p191 = pneg %p65
        $region30: #{tpu_custom_call.1} parent=27 // pred_check_branch
          %193 = sbr.rel (%p191) target = $region32
        $region31: #{tpu_custom_call.1} parent=27 // pred_region
          %195 = dma.done [#allocation3], 3456
        $region32: #{tpu_custom_call.1} parent=27 // pred_fallthru
          _
        %p196 = scmp.lt.s32.totalorder %s23, 1
        %s197 = scalar_select %p196, %s23, 1
        %s198 = smul.addr %s197, 3
        %s199 = smul.addr %s198, 8
        %s200 = scalar_lea.vmem %s0, %s199
        %p201 = pneg %p44
        %p202 = pneg %p41
        %p203 = pneg %p65
        %p204 = pneg %p62
        %p205 = pneg %p91
        %p206 = pneg %p88
        %s207 = sand.u32 %s78, 1
        %s208 = scalar_lea.sflag [#allocation4], %s207
        %s209 = sand.u32 %s78, 1
        %s210 = smul.addr %s209, 16
        %s211 = scalar_lea.vmem [#allocation5], %s210
        %p212 = pneg %p117
        %p213 = pneg %p114
        %s214 = sand.u32 %s23, 1
        %s215 = scalar_lea.sflag [#allocation7], %s214
        %s216 = sand.u32 %s104, 1
        %s217 = scalar_lea.vmem [#allocation6], %s216
        %p218 = pneg %p143
        %p219 = pneg %p140
        %s220 = sand.u32 %s23, 1
        %s221 = scalar_lea.sflag [#allocation7], %s220
        %s222 = sand.u32 %s130, 1
        %s223 = scalar_lea.vmem [#allocation8], %s222
        %p224 = scmp.lt.s32.totalorder %s23, 1
        %s225 = scalar_select %p224, %s23, 1
        %s226 = smul.addr %s225, 3
        %s227 = smul.addr %s226, 8
        %s228 = scalar_lea.vmem %s0, %s227
        %v229 = vld [vmem:[%s228] sm:$0xff]
        %v230 = vld [vmem:[%s228 + $0x8] sm:$0xff]
        %v231 = vld [vmem:[#allocation2] sm:$0xff]
        %v232 = vld [vmem:[#allocation2 + $0x8] sm:$0xff]
        %v233 = vld [vmem:[#allocation2 + $0x10] sm:$0xff]
        %v234 = vld [vmem:[#allocation2 + $0x18] sm:$0xff]
        %v235 = vld [vmem:[#allocation2 + $0x20] sm:$0xff]
        %v236 = vld [vmem:[#allocation2 + $0x28] sm:$0xff]
        %v237 = vld [vmem:[#allocation2 + $0x30] sm:$0xff]
        %v238 = vld [vmem:[#allocation2 + $0x38] sm:$0xff]
        %v239 = vld [vmem:[#allocation2 + $0x40] sm:$0xff]
        %v240 = vld [vmem:[%s228 + $0x1] sm:$0xff]
        %v241 = vld [vmem:[%s228 + $0x9] sm:$0xff]
        %s242 = scalar_lea.vmem [#allocation2], 72
        %v243 = vld [vmem:[%s242] sm:$0xff]
        %v244 = vld [vmem:[%s242 + $0x8] sm:$0xff]
        %v245 = vld [vmem:[%s242 + $0x10] sm:$0xff]
        %v246 = vld [vmem:[%s242 + $0x18] sm:$0xff]
        %v247 = vld [vmem:[%s242 + $0x20] sm:$0xff]
        %v248 = vld [vmem:[%s242 + $0x28] sm:$0xff]
        %v249 = vld [vmem:[%s242 + $0x30] sm:$0xff]
        %v250 = vld [vmem:[%s242 + $0x38] sm:$0xff]
        %v251 = vld [vmem:[%s242 + $0x40] sm:$0xff]
        %vm252 = vcmask 588800
        %v254 = vsel %vm252, %v240, 0
        %v257 = vsel %vm252, %v241, 0
        %259 = vmatpush.msra.mxu0 0.0
        %260 = vmatpush.msra.mxu0 0.0
        %261 = vmatpush.msra.mxu0 0.0
        %262 = vmatpush.msra.mxu0 0.0
        %263 = vmatpush.msra.mxu0 0.0
        %264 = vmatpush.msra.mxu0 0.0
        %265 = vmatpush.msra.mxu0 0.0
        %266 = vmatpush.msra.mxu0 %v251
        %267 = vmatpush.msra.mxu0 %v250
        %268 = vmatpush.msra.mxu0 %v249
        %269 = vmatpush.msra.mxu0 %v248
        %270 = vmatpush.msra.mxu0 %v247
        %271 = vmatpush.msra.mxu0 %v246
        %272 = vmatpush.msra.mxu0 %v245
        %273 = vmatpush.msra.mxu0 %v244
        %274 = vmatpush.msra.mxu0 %v243
        %275 = vmatmul.f32.gmra.mxu0 %v254
        %v276 = vpop.f32.mrf.mxu0
        %v277 = vadd.f32 0.0, %v276
        %278 = vmatmul.f32.gmra.mxu0 %v257
        %v279 = vpop.f32.mrf.mxu0
        %v280 = vadd.f32 0.0, %v279
        %281 = vdwg.mxu0
        %v283 = vsel %vm252, %v229, 0
        %v286 = vsel %vm252, %v230, 0
        %288 = vmatpush.msra.mxu0 0.0
        %289 = vmatpush.msra.mxu0 0.0
        %290 = vmatpush.msra.mxu0 0.0
        %291 = vmatpush.msra.mxu0 0.0
        %292 = vmatpush.msra.mxu0 0.0
        %293 = vmatpush.msra.mxu0 0.0
        %294 = vmatpush.msra.mxu0 0.0
        %295 = vmatpush.msra.mxu0 %v239
        %296 = vmatpush.msra.mxu0 %v238
        %297 = vmatpush.msra.mxu0 %v237
        %298 = vmatpush.msra.mxu0 %v236
        %299 = vmatpush.msra.mxu0 %v235
        %300 = vmatpush.msra.mxu0 %v234
        %301 = vmatpush.msra.mxu0 %v233
        %302 = vmatpush.msra.mxu0 %v232
        %303 = vmatpush.msra.mxu0 %v231
        %304 = vmatmul.f32.gmra.mxu0 %v283
        %v305 = vpop.f32.mrf.mxu0
        %v306 = vadd.f32 %v277, %v305
        %307 = vmatmul.f32.gmra.mxu0 %v286
        %v308 = vpop.f32.mrf.mxu0
        %v309 = vadd.f32 %v280, %v308
        %310 = vdwg.mxu0
        %v311 = vld [vmem:[%s228 + $0x2] sm:$0xff]
        %v312 = vld [vmem:[%s228 + $0xa] sm:$0xff]
        %s313 = scalar_lea.vmem [#allocation2], 144
        %v314 = vld [vmem:[%s313] sm:$0xff]
        %v315 = vld [vmem:[%s313 + $0x8] sm:$0xff]
        %v316 = vld [vmem:[%s313 + $0x10] sm:$0xff]
        %v317 = vld [vmem:[%s313 + $0x18] sm:$0xff]
        %v318 = vld [vmem:[%s313 + $0x20] sm:$0xff]
        %v319 = vld [vmem:[%s313 + $0x28] sm:$0xff]
        %v320 = vld [vmem:[%s313 + $0x30] sm:$0xff]
        %v321 = vld [vmem:[%s313 + $0x38] sm:$0xff]
        %v322 = vld [vmem:[%s313 + $0x40] sm:$0xff]
        %v324 = vsel %vm252, %v311, 0
        %v327 = vsel %vm252, %v312, 0
        %329 = vmatpush.msra.mxu0 0.0
        %330 = vmatpush.msra.mxu0 0.0
        %331 = vmatpush.msra.mxu0 0.0
        %332 = vmatpush.msra.mxu0 0.0
        %333 = vmatpush.msra.mxu0 0.0
        %334 = vmatpush.msra.mxu0 0.0
        %335 = vmatpush.msra.mxu0 0.0
        %336 = vmatpush.msra.mxu0 %v322
        %337 = vmatpush.msra.mxu0 %v321
        %338 = vmatpush.msra.mxu0 %v320
        %339 = vmatpush.msra.mxu0 %v319
        %340 = vmatpush.msra.mxu0 %v318
        %341 = vmatpush.msra.mxu0 %v317
        %342 = vmatpush.msra.mxu0 %v316
        %343 = vmatpush.msra.mxu0 %v315
        %344 = vmatpush.msra.mxu0 %v314
        %345 = vmatmul.f32.gmra.mxu0 %v324
        %v346 = vpop.f32.mrf.mxu0
        %v347 = vadd.f32 0.0, %v346
        %348 = vmatmul.f32.gmra.mxu0 %v327
        %v349 = vpop.f32.mrf.mxu0
        %v350 = vadd.f32 0.0, %v349
        %351 = vdwg.mxu0
        %v352 = vadd.f32 %v306, %v347
        %v353 = vadd.f32 %v309, %v350
        %354 = vst [vmem:[%s211] sm:$0xff] %v352
        %355 = vst [vmem:[%s211 + $0x8] sm:$0xff] %v353
        %v356 = vadd.f32 %v352, %v353
        %v357 = vrot.slane %v356, 4
        %v358 = vadd.f32 %v356, %v357
        %v359 = vrot.slane %v358, 2
        %v360 = vadd.f32 %v358, %v359
        %v361 = vrot.slane %v360, 1
        %v362 = vadd.f32 %v360, %v361
        %363 = vst [vmem:[%s217] sm:$0x1] %v362
        %v364 = vmul.f32 %v352, %v352
        %v365 = vmul.f32 %v353, %v353
        %v366 = vadd.f32 %v364, %v365
        %v367 = vrot.slane %v366, 4
        %v368 = vadd.f32 %v366, %v367
        %v369 = vrot.slane %v368, 2
        %v370 = vadd.f32 %v368, %v369
        %v371 = vrot.slane %v370, 1
        %v372 = vadd.f32 %v370, %v371
        %373 = vst [vmem:[%s223] sm:$0x1] %v372
        %s374 = sand.u32 %s78, 1
        %s375 = scalar_lea.sflag [#allocation4], %s374
        %s376 = sand.u32 %s78, 1
        %s377 = smul.addr %s376, 16
        %s378 = scalar_lea.vmem [#allocation5], %s377
        %s379 = sand.u32 %s23, 1
        %s380 = scalar_lea.sflag [#allocation7], %s379
        %s381 = sand.u32 %s104, 1
        %s382 = scalar_lea.vmem [#allocation6], %s381
        %s383 = sand.u32 %s23, 1
        %s384 = scalar_lea.sflag [#allocation7], %s383
        %s385 = sand.u32 %s130, 1
        %s386 = scalar_lea.vmem [#allocation8], %s385
        // Predicated region
        $region33: #{tpu_custom_call.1} parent=27 // pred_check
          %p387 = pneg %p88
        $region34: #{tpu_custom_call.1} parent=27 // pred_check_branch
          %389 = sbr.rel (%p387) target = $region36
        $region35: #{tpu_custom_call.1} parent=27 // pred_region
          %391 = vsyncadd %s375, 0
          %s392 = smul.addr %s23, 2
          %s393 = smul.addr %s392, 8
          %s394 = scalar_lea.hbm %s2, %s393
          %s395 = sshll.u32 %s378, 4
          %s396 = int_to_ptr.vmem [resolvable:$true] %s395
          %s397 = sshll.u32 %s394, 4
          %s398 = int_to_ptr.hbm [resolvable:$true] %s397
          %403 = dma.vmem_to_hbm [thread:$0]  %s396, 256, %s398, %s375, 128, 128, 8
        $region36: #{tpu_custom_call.1} parent=27 // pred_fallthru
          _
        // Predicated region
        $region37: #{tpu_custom_call.1} parent=27 // pred_check
          %p404 = pneg %p114
        $region38: #{tpu_custom_call.1} parent=27 // pred_check_branch
          %406 = sbr.rel (%p404) target = $region40
        $region39: #{tpu_custom_call.1} parent=27 // pred_region
          %408 = vsyncadd %s380, 0
          %s409 = scalar_lea.hbm %s3, %s23
          %s411 = sshll.u32 %s382, 4
          %s412 = int_to_ptr.vmem [resolvable:$true] %s411
          %s413 = sshll.u32 %s409, 4
          %s414 = int_to_ptr.hbm [resolvable:$true] %s413
          %416 = dma.vmem_to_hbm [thread:$0]  %s412, 16, %s414, %s380
        $region40: #{tpu_custom_call.1} parent=27 // pred_fallthru
          _
        // Predicated region
        $region41: #{tpu_custom_call.1} parent=27 // pred_check
          %p417 = pneg %p140
        $region42: #{tpu_custom_call.1} parent=27 // pred_check_branch
          %419 = sbr.rel (%p417) target = $region44
        $region43: #{tpu_custom_call.1} parent=27 // pred_region
          %421 = vsyncadd %s384, 0
          %s422 = scalar_lea.hbm %s4, %s23
          %s424 = sshll.u32 %s386, 4
          %s425 = int_to_ptr.vmem [resolvable:$true] %s424
          %s426 = sshll.u32 %s422, 4
          %s427 = int_to_ptr.hbm [resolvable:$true] %s426
          %429 = dma.vmem_to_hbm [thread:$0]  %s425, 16, %s427, %s384
        $region44: #{tpu_custom_call.1} parent=27 // pred_fallthru
          _
      $region28: #{tpu_custom_call.1} parent=5 // pred_fallthru
        _
      %p430 = scmp.le.s32.totalorder 2, %s18
      // Predicated region
      $region45: #{tpu_custom_call.1} parent=5 // pred_check
        %p431 = pneg %p430
      $region46: #{tpu_custom_call.1} parent=5 // pred_check_branch
        %433 = sbr.rel (%p431) target = $region48
      $region47: #{tpu_custom_call.1} parent=5 // pred_region
        %s434 = ssub.s32 %s18, 2
        // Predicated region
        $region49: #{tpu_custom_call.1} parent=47 // pred_check
          %p435 = pneg %p94
        $region50: #{tpu_custom_call.1} parent=47 // pred_check_branch
          %437 = sbr.rel (%p435) target = $region52
        $region51: #{tpu_custom_call.1} parent=47 // pred_region
          %s438 = sand.u32 %s79, 1
          %s439 = scalar_lea.sflag [#allocation4], %s438
          %s440 = sand.u32 %s79, 1
          %s441 = smul.addr %s440, 16
          %s442 = scalar_lea.vmem [#allocation5], %s441
          %444 = dma.done %s439, 256
        $region52: #{tpu_custom_call.1} parent=47 // pred_fallthru
          _
        // Predicated region
        $region53: #{tpu_custom_call.1} parent=47 // pred_check
          %p445 = pneg %p120
        $region54: #{tpu_custom_call.1} parent=47 // pred_check_branch
          %447 = sbr.rel (%p445) target = $region56
        $region55: #{tpu_custom_call.1} parent=47 // pred_region
          %s448 = sand.u32 %s24, 1
          %s449 = scalar_lea.sflag [#allocation7], %s448
          %s450 = sand.u32 %s105, 1
          %s451 = scalar_lea.vmem [#allocation6], %s450
          %453 = dma.done %s449, 16
        $region56: #{tpu_custom_call.1} parent=47 // pred_fallthru
          _
        // Predicated region
        $region57: #{tpu_custom_call.1} parent=47 // pred_check
          %p454 = pneg %p146
        $region58: #{tpu_custom_call.1} parent=47 // pred_check_branch
          %456 = sbr.rel (%p454) target = $region60
        $region59: #{tpu_custom_call.1} parent=47 // pred_region
          %s457 = sand.u32 %s24, 1
          %s458 = scalar_lea.sflag [#allocation7], %s457
          %s459 = sand.u32 %s131, 1
          %s460 = scalar_lea.vmem [#allocation8], %s459
          %462 = dma.done %s458, 16
        $region60: #{tpu_custom_call.1} parent=47 // pred_fallthru
          _
      $region48: #{tpu_custom_call.1} parent=5 // pred_fallthru
        _
    $region6: #{tpu_custom_call.1} parent=1 // loop_footer
      %s22 = sadd.s32 1, %s18
    $region7: #{tpu_custom_call.1} parent=1 // loop_footer_branch
      %17 = sbr.rel target = $region3
    $region8: #{tpu_custom_call.1} parent=1 // loop_exit
      _
    %463 = vsyncpa [#allocation3], 1
    %s464 = scalar_lea.sflag [#allocation3], 1
    %465 = vsyncpa %s464, 1
    %466 = vsyncpa [#allocation4], 1
    %s467 = scalar_lea.sflag [#allocation4], 1
    %468 = vsyncpa %s467, 1
    %469 = vsyncpa [#allocation7], 1
    %s470 = scalar_lea.sflag [#allocation7], 1
    %471 = vsyncpa %s470, 1

</llo_original>
